<compile_context>
chip_gen: v6e
topology: v6e:2x2x1
jax: 0.10.0
libtpu: 0.0.40
codegen_flags: <defaults>
</compile_context>

<pallas_src>
import jax
import jax.numpy as jnp
from jax.experimental import pallas as pl
from jax.experimental.pallas import tpu as pltpu


def _make_ipn_kernel(num_fields):
    """Builds the kernel for a fixed (static) number of fields."""

    def kernel(x_ref, o_ref):
        # x_ref : (TB, nf, E) in VMEM
        # o_ref : (TB, P)     in VMEM,  P = nf*(nf-1)/2
        x = x_ref[...].astype(jnp.float32)  # in-kernel cast, f32 accumulate

        # For each anchor field i, multiply it against all later fields j > i
        # (one contiguous slice), reduce over the embed (lane) axis and
        # concatenate the per-anchor results.  Pair ordering matches the
        # PyTorch row/col loops exactly: (0,1),(0,2),...,(1,2),...
        pieces = []
        for i in range(num_fields - 1):
            xi = x[:, i:i + 1, :]        # (TB, 1, E)         static slice
            xj = x[:, i + 1:, :]         # (TB, nf-1-i, E)    static slice
            # broadcast-mul over the sublane axis, reduce over lanes (E)
            pieces.append(jnp.sum(xi * xj, axis=-1))   # (TB, nf-1-i)

        res = pieces[0] if len(pieces) == 1 else jnp.concatenate(pieces, axis=-1)
        o_ref[...] = res.astype(o_ref.dtype)

    return kernel


def inner_product_network(x, *, block_b=512):
    """Pallas equivalent of InnerProductNetwork.forward.

    x      : (B, num_fields, embed_dim) float array
    returns: (B, num_fields * (num_fields - 1) // 2), same dtype as x
    """
    B, nf, E = x.shape
    assert nf >= 2, "InnerProductNetwork needs at least 2 fields"
    P = nf * (nf - 1) // 2

    # Batch tile: as large as reasonable while staying well inside the scoped
    # VMEM budget (x tile is TB*nf*E*4 bytes, double buffered).  Partial last
    # blocks are fine: rows are independent, so padded rows only produce
    # padded (discarded) output rows.
    TB = min(block_b, B)
    grid = (pl.cdiv(B, TB),)

    itemsize = jnp.dtype(x.dtype).itemsize
    cost = pl.CostEstimate(
        flops=2 * B * P * E,
        transcendentals=0,
        bytes_accessed=itemsize * (B * nf * E + B * P),
    )

    out = pl.pallas_call(
        _make_ipn_kernel(nf),
        out_shape=jax.ShapeDtypeStruct((B, P), x.dtype),
        grid_spec=pltpu.PrefetchScalarGridSpec(
            num_scalar_prefetch=0,
            grid=grid,
            in_specs=[
                pl.BlockSpec((TB, nf, E), lambda i: (i, 0, 0)),
            ],
            out_specs=pl.BlockSpec((TB, P), lambda i: (i, 0)),
        ),
        compiler_params=pltpu.CompilerParams(
            # batch tiles are independent -> shard across TensorCores (v7x)
            dimension_semantics=("parallel",),
        ),
        cost_estimate=cost,
    )(x)
    return out


if __name__ == "__main__":
    key = jax.random.PRNGKey(0)

    batch = 48
    num_fields = 4
    embed_dim = 16

    x = jax.random.normal(key, (batch, num_fields, embed_dim), dtype=jnp.float32)

    # Use a small batch tile so the demo actually exercises the tiled /
    # pipelined path (grid = (3,)) instead of a single block.
    out = inner_product_network(x, block_b=16)
    out = jax.block_until_ready(out)

    # Pure-JAX reference: same math as the PyTorch module.
    row, col = [], []
    for i in range(num_fields - 1):
        for j in range(i + 1, num_fields):
            row.append(i)
            col.append(j)
    ref = jnp.sum(x[:, jnp.array(row), :] * x[:, jnp.array(col), :], axis=2)

    num_pairs = num_fields * (num_fields - 1) // 2
    assert out.shape == (batch, num_pairs), out.shape
    assert jnp.allclose(out, ref, atol=1e-5, rtol=1e-5)

    print("KERNEL_OK")
</pallas_src>

<mosaic_0001>
module attributes {stable_mosaic.version = 11 : i64} {
  func.func @kernel(%arg0: i32, %arg1: memref<16x4x16xf32, #tpu.memory_space<vmem>>, %arg2: memref<16x6xf32, #tpu.memory_space<vmem>>) attributes {dimension_semantics = [#tpu.dimension_semantics<parallel>], iteration_bounds = array<i64: 3>, scalar_prefetch = 0 : i64, scratch_operands = 0 : i64, tpu.core_type = #tpu.core_type<tc>, window_params = [{transform_indices = @transform_0, window_bounds = array<i64: 16, 4, 16>}, {transform_indices = @transform_1, window_bounds = array<i64: 16, 6>}]} {
    %c0 = arith.constant 0 : index
    %c0_0 = arith.constant 0 : index
    %c0_1 = arith.constant 0 : index
    %0 = vector.load %arg1[%c0, %c0_0, %c0_1] : memref<16x4x16xf32, #tpu.memory_space<vmem>>, vector<16x4x16xf32>
    %1 = vector.extract_strided_slice %0 {offsets = [0, 0, 0], sizes = [16, 1, 16], strides = [1, 1, 1]} : vector<16x4x16xf32> to vector<16x1x16xf32>
    %2 = vector.extract_strided_slice %0 {offsets = [0, 1, 0], sizes = [16, 3, 16], strides = [1, 1, 1]} : vector<16x4x16xf32> to vector<16x3x16xf32>
    %3 = vector.broadcast %1 : vector<16x1x16xf32> to vector<16x3x16xf32>
    %4 = arith.mulf %3, %2 : vector<16x3x16xf32>
    %cst = arith.constant dense<0.000000e+00> : vector<16x3xf32>
    %5 = vector.multi_reduction <add>, %4, %cst [2] : vector<16x3x16xf32> to vector<16x3xf32>
    %6 = vector.extract_strided_slice %0 {offsets = [0, 1, 0], sizes = [16, 1, 16], strides = [1, 1, 1]} : vector<16x4x16xf32> to vector<16x1x16xf32>
    %7 = vector.extract_strided_slice %0 {offsets = [0, 2, 0], sizes = [16, 2, 16], strides = [1, 1, 1]} : vector<16x4x16xf32> to vector<16x2x16xf32>
    %8 = vector.broadcast %6 : vector<16x1x16xf32> to vector<16x2x16xf32>
    %9 = arith.mulf %8, %7 : vector<16x2x16xf32>
    %cst_2 = arith.constant dense<0.000000e+00> : vector<16x2xf32>
    %10 = vector.multi_reduction <add>, %9, %cst_2 [2] : vector<16x2x16xf32> to vector<16x2xf32>
    %11 = vector.extract_strided_slice %0 {offsets = [0, 2, 0], sizes = [16, 1, 16], strides = [1, 1, 1]} : vector<16x4x16xf32> to vector<16x1x16xf32>
    %12 = vector.extract_strided_slice %0 {offsets = [0, 3, 0], sizes = [16, 1, 16], strides = [1, 1, 1]} : vector<16x4x16xf32> to vector<16x1x16xf32>
    %13 = arith.mulf %11, %12 : vector<16x1x16xf32>
    %cst_3 = arith.constant dense<0.000000e+00> : vector<16x1xf32>
    %14 = vector.multi_reduction <add>, %13, %cst_3 [2] : vector<16x1x16xf32> to vector<16x1xf32>
    %15 = tpu.concatenate %5, %10, %14 in 1 : vector<16x3xf32>, vector<16x2xf32>, vector<16x1xf32> -> vector<16x6xf32>
    %c0_4 = arith.constant 0 : index
    %c0_5 = arith.constant 0 : index
    %16 = vector.load %arg2[%c0_4, %c0_5] : memref<16x6xf32, #tpu.memory_space<vmem>>, vector<16x6xf32>
    tpu.vector_store %arg2[%c0_4, %c0_5], %15 {strides = array<i32>} : memref<16x6xf32, #tpu.memory_space<vmem>>, vector<16x6xf32>,
    return
  }
  func.func @transform_0(%arg0: i32) -> (i32, i32, i32) {
    %c0_i32 = arith.constant 0 : i32
    %c0_i32_0 = arith.constant 0 : i32
    %c0_i32_1 = arith.constant 0 : i32
    return %arg0, %c0_i32, %c0_i32_0 : i32, i32, i32
  }
  func.func @transform_1(%arg0: i32) -> (i32, i32) {
    %c0_i32 = arith.constant 0 : i32
    %c0_i32_0 = arith.constant 0 : i32
    return %arg0, %c0_i32 : i32, i32
  }
}

</mosaic_0001>

<llo_original>
// kernel: tpu_custom_call.1
$region0: #{tpu_custom_call.1}
  #allocation0 [shape = 'u32[]', space=smem, size = 0x4, offset = 0x4, fixed_abs, tag = 'smem constant byte address 0x4 - core index']
  #allocation1 [shape = 'u32[144,128]{1,0:T(1,128)}', space=vmem, size = 0x12000, scoped, tag = 'internal scratch']
  %s0 = inlined_call_operand.vmem [shape: f32[48,4,16], index: 0, kind: input, shape index: {}]
  %s1 = inlined_call_operand.vmem [shape: f32[48,6], index: 1, kind: output, shape index: {}]
  %s2 = sld [smem:[#allocation0]]
  $region37: #{tpu_custom_call.1} parent=0
    _
  %s4 = ssub.s32 1, %s2
  %s5 = scalar_select 0, %s4, %s2
  loop: start=0, step=1, limit=5
  $region2: #{tpu_custom_call.1} parent=0 // loop_pre_header
    _
  $region3: #{tpu_custom_call.1} parent=0 // loop_header
    %s7 = sphi 0, %s11
    %p8 = scmp.ge.s32.totalorder %s7, 5
    %s17 = sphi 0, %s19
    %s20 = sphi 0, %s17
    %s21 = sphi 0, %s20
    %s37 = sphi 0, %s21
    %s43 = sphi 0, %s45
    %s46 = sphi 0, %s43
    %s47 = sphi 0, %s46
    %s63 = sphi 0, %s47
  $region4: #{tpu_custom_call.1} parent=0 // loop_header_branch
    %10 = sbr.rel (%p8) target = $region8
  $region5: #{tpu_custom_call.1} parent=0 // loop_body
    %s12 = ssub.s32 %s7, 1
    %s13 = ssub.s32 %s7, 2
    %s14 = sadd.s32 %s7, 1
    %s15 = ssub.s32 %s7, %s14
    %p16 = scmp.eq.s32.totalorder %s15, 0
    %s18 = sadd.s32 %s17, 1
    %s19 = scalar_select %p16, %s17, %s18
    %p22 = pneg %p16
    %p23 = scmp.eq.s32.totalorder %s7, 2
    %p24 = por %p22, %p23
    %p25 = scmp.ne.s32.totalorder %s17, %s20
    %p26 = scmp.eq.s32.totalorder %s7, 0
    %p27 = por %p25, %p26
    %p28 = scmp.ne.s32.totalorder %s17, %s20
    %p29 = scmp.eq.s32.totalorder %s12, 2
    %p30 = por %p28, %p29
    %p31 = scmp.ne.s32.totalorder %s20, %s21
    %p32 = scmp.eq.s32.totalorder %s12, 0
    %p33 = por %p31, %p32
    %p34 = scmp.ne.s32.totalorder %s20, %s21
    %p35 = scmp.eq.s32.totalorder %s13, 2
    %p36 = por %p34, %p35
    %p38 = scmp.ne.s32.totalorder %s21, %s37
    %p39 = scmp.eq.s32.totalorder %s13, 0
    %p40 = por %p38, %p39
    %s41 = ssub.s32 %s7, %s14
    %p42 = scmp.eq.s32.totalorder %s41, 0
    %s44 = sadd.s32 %s43, 1
    %s45 = scalar_select %p42, %s43, %s44
    %p48 = pneg %p42
    %p49 = scmp.eq.s32.totalorder %s7, 2
    %p50 = por %p48, %p49
    %p51 = scmp.ne.s32.totalorder %s43, %s46
    %p52 = scmp.eq.s32.totalorder %s7, 0
    %p53 = por %p51, %p52
    %p54 = scmp.ne.s32.totalorder %s43, %s46
    %p55 = scmp.eq.s32.totalorder %s12, 2
    %p56 = por %p54, %p55
    %p57 = scmp.ne.s32.totalorder %s46, %s47
    %p58 = scmp.eq.s32.totalorder %s12, 0
    %p59 = por %p57, %p58
    %p60 = scmp.ne.s32.totalorder %s46, %s47
    %p61 = scmp.eq.s32.totalorder %s13, 2
    %p62 = por %p60, %p61
    %p64 = scmp.ne.s32.totalorder %s47, %s63
    %p65 = scmp.eq.s32.totalorder %s13, 0
    %p66 = por %p64, %p65
    %p67 = scmp.le.s32.totalorder 1, %s7
    %p68 = scmp.lt.s32.totalorder %s7, 4
    %p69 = pnand %p67, %p68
    %p70 = pneg %p69
    // Predicated region
    $region9: #{tpu_custom_call.1} parent=5 // pred_check
      _
    $region10: #{tpu_custom_call.1} parent=5 // pred_check_branch
      %72 = sbr.rel (%p69) target = $region12
    $region11: #{tpu_custom_call.1} parent=5 // pred_region
      %s73 = ssub.s32 %s7, 1
    $region12: #{tpu_custom_call.1} parent=5 // pred_fallthru
      _
    %p74 = scmp.lt.s32.totalorder %s7, 3
    // Predicated region
    $region13: #{tpu_custom_call.1} parent=5 // pred_check
      %p75 = pneg %p74
    $region14: #{tpu_custom_call.1} parent=5 // pred_check_branch
      %77 = sbr.rel (%p75) target = $region16
    $region15: #{tpu_custom_call.1} parent=5 // pred_region
      // Predicated region
      $region17: #{tpu_custom_call.1} parent=15 // pred_check
        %p78 = pneg %p27
      $region18: #{tpu_custom_call.1} parent=15 // pred_check_branch
        %80 = sbr.rel (%p78) target = $region20
      $region19: #{tpu_custom_call.1} parent=15 // pred_region
        %s81 = smul.u32 16, %s7
        %p82 = scmp.lt.s32.totalorder %s81, 47
        %s83 = scalar_select %p82, %s81, 47
        %s84 = smul.addr %s83, 4
        %s85 = scalar_lea.vmem %s0, %s84
        %s86 = smul.u32 16, %s7
      $region20: #{tpu_custom_call.1} parent=15 // pred_fallthru
        _
    $region16: #{tpu_custom_call.1} parent=5 // pred_fallthru
      _
    %p87 = scmp.le.s32.totalorder 1, %s7
    %p88 = scmp.lt.s32.totalorder %s7, 4
    %p89 = pnand %p87, %p88
    %p90 = pneg %p89
    // Predicated region
    $region21: #{tpu_custom_call.1} parent=5 // pred_check
      _
    $region22: #{tpu_custom_call.1} parent=5 // pred_check_branch
      %92 = sbr.rel (%p89) target = $region24
    $region23: #{tpu_custom_call.1} parent=5 // pred_region
      %s93 = ssub.s32 %s7, 1
      %s94 = smul.u32 16, %s12
      %p95 = scmp.lt.s32.totalorder %s94, 47
      %s96 = scalar_select %p95, %s94, 47
      %s97 = smul.addr %s96, 4
      %s98 = scalar_lea.vmem %s0, %s97
      %p99 = pneg %p33
      %p100 = pneg %p30
      %p101 = pneg %p59
      %p102 = pneg %p56
      %s103 = smul.u32 2, %s12
      %p104 = scmp.lt.s32.totalorder %s103, 5
      %s105 = scalar_select %p104, %s103, 5
      %s106 = smul.addr %s105, 8
      %s107 = scalar_lea.vmem %s1, %s106
      %s108 = smul.u32 16, %s12
      %p109 = scmp.lt.s32.totalorder %s108, 47
      %s110 = scalar_select %p109, %s108, 47
      %s111 = smul.addr %s110, 4
      %s112 = scalar_lea.vmem %s0, %s111
      %s113 = smul.u32 16, %s12
      %s114 = smul.u32 2, %s12
      %p115 = scmp.lt.s32.totalorder %s114, 5
      %s116 = scalar_select %p115, %s114, 5
      %s117 = smul.addr %s116, 8
      %s118 = scalar_lea.vmem %s1, %s117
      %s119 = smul.u32 2, %s12
      %v120 = vld [vmem:[%s112] sm:$0xf]
      %v121 = vld [vmem:[%s112 + $0x4] sm:$0xf]
      %v122 = vld [vmem:[%s112 + $0x8] sm:$0xf]
      %v123 = vld [vmem:[%s112 + $0xc] sm:$0xf]
      %v124 = vld [vmem:[%s112 + $0x10] sm:$0xf]
      %v125 = vld [vmem:[%s112 + $0x14] sm:$0xf]
      %v126 = vld [vmem:[%s112 + $0x18] sm:$0xf]
      %v127 = vld [vmem:[%s112 + $0x1c] sm:$0xf]
      %v128 = vld [vmem:[%s112 + $0x20] sm:$0xf]
      %v129 = vld [vmem:[%s112 + $0x24] sm:$0xf]
      %v130 = vld [vmem:[%s112 + $0x28] sm:$0xf]
      %v131 = vld [vmem:[%s112 + $0x2c] sm:$0xf]
      %v132 = vld [vmem:[%s112 + $0x30] sm:$0xf]
      %v133 = vld [vmem:[%s112 + $0x34] sm:$0xf]
      %v134 = vld [vmem:[%s112 + $0x38] sm:$0xf]
      %v135 = vld [vmem:[%s112 + $0x3c] sm:$0xf]
      %v136 = vlaneseq
      %v137 = vshrl.u32 %v136, 7
      %v138 = vsub.s32 0, %v137
      %v139 = vrot.slane %v120, %v138
      %v140 = vlaneseq
      %v141 = vshrl.u32 %v140, 7
      %v142 = vsub.s32 0, %v141
      %v143 = vrot.slane %v121, %v142
      %v144 = vlaneseq
      %v145 = vshrl.u32 %v144, 7
      %v146 = vsub.s32 0, %v145
      %v147 = vrot.slane %v122, %v146
      %v148 = vlaneseq
      %v149 = vshrl.u32 %v148, 7
      %v150 = vsub.s32 0, %v149
      %v151 = vrot.slane %v123, %v150
      %v152 = vlaneseq
      %v153 = vshrl.u32 %v152, 7
      %v154 = vsub.s32 0, %v153
      %v155 = vrot.slane %v124, %v154
      %v156 = vlaneseq
      %v157 = vshrl.u32 %v156, 7
      %v158 = vsub.s32 0, %v157
      %v159 = vrot.slane %v125, %v158
      %v160 = vlaneseq
      %v161 = vshrl.u32 %v160, 7
      %v162 = vsub.s32 0, %v161
      %v163 = vrot.slane %v126, %v162
      %v164 = vlaneseq
      %v165 = vshrl.u32 %v164, 7
      %v166 = vsub.s32 0, %v165
      %v167 = vrot.slane %v127, %v166
      %v168 = vlaneseq
      %v169 = vshrl.u32 %v168, 7
      %v170 = vsub.s32 0, %v169
      %v171 = vrot.slane %v128, %v170
      %v172 = vlaneseq
      %v173 = vshrl.u32 %v172, 7
      %v174 = vsub.s32 0, %v173
      %v175 = vrot.slane %v129, %v174
      %v176 = vlaneseq
      %v177 = vshrl.u32 %v176, 7
      %v178 = vsub.s32 0, %v177
      %v179 = vrot.slane %v130, %v178
      %v180 = vlaneseq
      %v181 = vshrl.u32 %v180, 7
      %v182 = vsub.s32 0, %v181
      %v183 = vrot.slane %v131, %v182
      %v184 = vlaneseq
      %v185 = vshrl.u32 %v184, 7
      %v186 = vsub.s32 0, %v185
      %v187 = vrot.slane %v132, %v186
      %v188 = vlaneseq
      %v189 = vshrl.u32 %v188, 7
      %v190 = vsub.s32 0, %v189
      %v191 = vrot.slane %v133, %v190
      %v192 = vlaneseq
      %v193 = vshrl.u32 %v192, 7
      %v194 = vsub.s32 0, %v193
      %v195 = vrot.slane %v134, %v194
      %v196 = vlaneseq
      %v197 = vshrl.u32 %v196, 7
      %v198 = vsub.s32 0, %v197
      %v199 = vrot.slane %v135, %v198
      %v200 = vmul.f32 %v139, %v120
      %v201 = vmul.f32 %v143, %v121
      %v202 = vmul.f32 %v147, %v122
      %v203 = vmul.f32 %v151, %v123
      %v204 = vmul.f32 %v155, %v124
      %v205 = vmul.f32 %v159, %v125
      %v206 = vmul.f32 %v163, %v126
      %v207 = vmul.f32 %v167, %v127
      %v208 = vmul.f32 %v171, %v128
      %v209 = vmul.f32 %v175, %v129
      %v210 = vmul.f32 %v179, %v130
      %v211 = vmul.f32 %v183, %v131
      %v212 = vmul.f32 %v187, %v132
      %v213 = vmul.f32 %v191, %v133
      %v214 = vmul.f32 %v195, %v134
      %v215 = vmul.f32 %v199, %v135
      %vm216 = vcmask 125953
      %v217 = vsel %vm216, %v200, 0.0
      %218 = vadd.xlane.f32.xlu0 %v217
      %v219 = vpop.xlane.xlu0 %218
      %v220 = vsel %vm216, %v201, 0.0
      %221 = vadd.xlane.f32.xlu0 %v220
      %v222 = vpop.xlane.xlu0 %221
      %v223 = vsel %vm216, %v202, 0.0
      %224 = vadd.xlane.f32.xlu0 %v223
      %v225 = vpop.xlane.xlu0 %224
      %v226 = vsel %vm216, %v203, 0.0
      %227 = vadd.xlane.f32.xlu0 %v226
      %v228 = vpop.xlane.xlu0 %227
      %v229 = vsel %vm216, %v204, 0.0
      %230 = vadd.xlane.f32.xlu0 %v229
      %v231 = vpop.xlane.xlu0 %230
      %v232 = vsel %vm216, %v205, 0.0
      %233 = vadd.xlane.f32.xlu0 %v232
      %v234 = vpop.xlane.xlu0 %233
      %v235 = vsel %vm216, %v206, 0.0
      %236 = vadd.xlane.f32.xlu0 %v235
      %v237 = vpop.xlane.xlu0 %236
      %v238 = vsel %vm216, %v207, 0.0
      %239 = vadd.xlane.f32.xlu0 %v238
      %v240 = vpop.xlane.xlu0 %239
      %v241 = vsel %vm216, %v208, 0.0
      %242 = vadd.xlane.f32.xlu0 %v241
      %v243 = vpop.xlane.xlu0 %242
      %v244 = vsel %vm216, %v209, 0.0
      %245 = vadd.xlane.f32.xlu0 %v244
      %v246 = vpop.xlane.xlu0 %245
      %v247 = vsel %vm216, %v210, 0.0
      %248 = vadd.xlane.f32.xlu0 %v247
      %v249 = vpop.xlane.xlu0 %248
      %v250 = vsel %vm216, %v211, 0.0
      %251 = vadd.xlane.f32.xlu0 %v250
      %v252 = vpop.xlane.xlu0 %251
      %v253 = vsel %vm216, %v212, 0.0
      %254 = vadd.xlane.f32.xlu0 %v253
      %v255 = vpop.xlane.xlu0 %254
      %v256 = vsel %vm216, %v213, 0.0
      %257 = vadd.xlane.f32.xlu0 %v256
      %v258 = vpop.xlane.xlu0 %257
      %v259 = vsel %vm216, %v214, 0.0
      %260 = vadd.xlane.f32.xlu0 %v259
      %v261 = vpop.xlane.xlu0 %260
      %v262 = vsel %vm216, %v215, 0.0
      %263 = vadd.xlane.f32.xlu0 %v262
      %v264 = vpop.xlane.xlu0 %263
      %v265 = vlaneseq
      %v266 = vshrl.u32 %v265, 7
      %v267 = vsub.s32 1, %v266
      %v268 = vrot.slane %v120, %v267
      %v269 = vlaneseq
      %v270 = vshrl.u32 %v269, 7
      %v271 = vsub.s32 1, %v270
      %v272 = vrot.slane %v121, %v271
      %v273 = vlaneseq
      %v274 = vshrl.u32 %v273, 7
      %v275 = vsub.s32 1, %v274
      %v276 = vrot.slane %v122, %v275
      %v277 = vlaneseq
      %v278 = vshrl.u32 %v277, 7
      %v279 = vsub.s32 1, %v278
      %v280 = vrot.slane %v123, %v279
      %v281 = vlaneseq
      %v282 = vshrl.u32 %v281, 7
      %v283 = vsub.s32 1, %v282
      %v284 = vrot.slane %v124, %v283
      %v285 = vlaneseq
      %v286 = vshrl.u32 %v285, 7
      %v287 = vsub.s32 1, %v286
      %v288 = vrot.slane %v125, %v287
      %v289 = vlaneseq
      %v290 = vshrl.u32 %v289, 7
      %v291 = vsub.s32 1, %v290
      %v292 = vrot.slane %v126, %v291
      %v293 = vlaneseq
      %v294 = vshrl.u32 %v293, 7
      %v295 = vsub.s32 1, %v294
      %v296 = vrot.slane %v127, %v295
      %v297 = vlaneseq
      %v298 = vshrl.u32 %v297, 7
      %v299 = vsub.s32 1, %v298
      %v300 = vrot.slane %v128, %v299
      %v301 = vlaneseq
      %v302 = vshrl.u32 %v301, 7
      %v303 = vsub.s32 1, %v302
      %v304 = vrot.slane %v129, %v303
      %v305 = vlaneseq
      %v306 = vshrl.u32 %v305, 7
      %v307 = vsub.s32 1, %v306
      %v308 = vrot.slane %v130, %v307
      %v309 = vlaneseq
      %v310 = vshrl.u32 %v309, 7
      %v311 = vsub.s32 1, %v310
      %v312 = vrot.slane %v131, %v311
      %v313 = vlaneseq
      %v314 = vshrl.u32 %v313, 7
      %v315 = vsub.s32 1, %v314
      %v316 = vrot.slane %v132, %v315
      %v317 = vlaneseq
      %v318 = vshrl.u32 %v317, 7
      %v319 = vsub.s32 1, %v318
      %v320 = vrot.slane %v133, %v319
      %v321 = vlaneseq
      %v322 = vshrl.u32 %v321, 7
      %v323 = vsub.s32 1, %v322
      %v324 = vrot.slane %v134, %v323
      %v325 = vlaneseq
      %v326 = vshrl.u32 %v325, 7
      %v327 = vsub.s32 1, %v326
      %v328 = vrot.slane %v135, %v327
      %v329 = vmul.f32 %v268, %v120
      %v330 = vmul.f32 %v272, %v121
      %v331 = vmul.f32 %v276, %v122
      %v332 = vmul.f32 %v280, %v123
      %v333 = vmul.f32 %v284, %v124
      %v334 = vmul.f32 %v288, %v125
      %v335 = vmul.f32 %v292, %v126
      %v336 = vmul.f32 %v296, %v127
      %v337 = vmul.f32 %v300, %v128
      %v338 = vmul.f32 %v304, %v129
      %v339 = vmul.f32 %v308, %v130
      %v340 = vmul.f32 %v312, %v131
      %v341 = vmul.f32 %v316, %v132
      %v342 = vmul.f32 %v320, %v133
      %v343 = vmul.f32 %v324, %v134
      %v344 = vmul.f32 %v328, %v135
      %vm345 = vcmask 125954
      %v346 = vsel %vm345, %v329, 0.0
      %347 = vadd.xlane.f32.xlu0 %v346
      %v348 = vpop.xlane.xlu0 %347
      %v349 = vsel %vm345, %v330, 0.0
      %350 = vadd.xlane.f32.xlu0 %v349
      %v351 = vpop.xlane.xlu0 %350
      %v352 = vsel %vm345, %v331, 0.0
      %353 = vadd.xlane.f32.xlu0 %v352
      %v354 = vpop.xlane.xlu0 %353
      %v355 = vsel %vm345, %v332, 0.0
      %356 = vadd.xlane.f32.xlu0 %v355
      %v357 = vpop.xlane.xlu0 %356
      %v358 = vsel %vm345, %v333, 0.0
      %359 = vadd.xlane.f32.xlu0 %v358
      %v360 = vpop.xlane.xlu0 %359
      %v361 = vsel %vm345, %v334, 0.0
      %362 = vadd.xlane.f32.xlu0 %v361
      %v363 = vpop.xlane.xlu0 %362
      %v364 = vsel %vm345, %v335, 0.0
      %365 = vadd.xlane.f32.xlu0 %v364
      %v366 = vpop.xlane.xlu0 %365
      %v367 = vsel %vm345, %v336, 0.0
      %368 = vadd.xlane.f32.xlu0 %v367
      %v369 = vpop.xlane.xlu0 %368
      %v370 = vsel %vm345, %v337, 0.0
      %371 = vadd.xlane.f32.xlu0 %v370
      %v372 = vpop.xlane.xlu0 %371
      %v373 = vsel %vm345, %v338, 0.0
      %374 = vadd.xlane.f32.xlu0 %v373
      %v375 = vpop.xlane.xlu0 %374
      %v376 = vsel %vm345, %v339, 0.0
      %377 = vadd.xlane.f32.xlu0 %v376
      %v378 = vpop.xlane.xlu0 %377
      %v379 = vsel %vm345, %v340, 0.0
      %380 = vadd.xlane.f32.xlu0 %v379
      %v381 = vpop.xlane.xlu0 %380
      %v382 = vsel %vm345, %v341, 0.0
      %383 = vadd.xlane.f32.xlu0 %v382
      %v384 = vpop.xlane.xlu0 %383
      %v385 = vsel %vm345, %v342, 0.0
      %386 = vadd.xlane.f32.xlu0 %v385
      %v387 = vpop.xlane.xlu0 %386
      %v388 = vsel %vm345, %v343, 0.0
      %389 = vadd.xlane.f32.xlu0 %v388
      %v390 = vpop.xlane.xlu0 %389
      %v391 = vsel %vm345, %v344, 0.0
      %392 = vadd.xlane.f32.xlu0 %v391
      %v393 = vpop.xlane.xlu0 %392
      %v410 = vrot.slane %v120, 1
      %v411 = vrot.slane %v121, 1
      %v412 = vrot.slane %v122, 1
      %v413 = vrot.slane %v123, 1
      %v414 = vrot.slane %v124, 1
      %v415 = vrot.slane %v125, 1
      %v416 = vrot.slane %v126, 1
      %v417 = vrot.slane %v127, 1
      %v418 = vrot.slane %v128, 1
      %v419 = vrot.slane %v129, 1
      %v420 = vrot.slane %v130, 1
      %v421 = vrot.slane %v131, 1
      %v422 = vrot.slane %v132, 1
      %v423 = vrot.slane %v133, 1
      %v424 = vrot.slane %v134, 1
      %v425 = vrot.slane %v135, 1
      %v442 = vmul.f32 %v120, %v410
      %v443 = vmul.f32 %v121, %v411
      %v444 = vmul.f32 %v122, %v412
      %v445 = vmul.f32 %v123, %v413
      %v446 = vmul.f32 %v124, %v414
      %v447 = vmul.f32 %v125, %v415
      %v448 = vmul.f32 %v126, %v416
      %v449 = vmul.f32 %v127, %v417
      %v450 = vmul.f32 %v128, %v418
      %v451 = vmul.f32 %v129, %v419
      %v452 = vmul.f32 %v130, %v420
      %v453 = vmul.f32 %v131, %v421
      %v454 = vmul.f32 %v132, %v422
      %v455 = vmul.f32 %v133, %v423
      %v456 = vmul.f32 %v134, %v424
      %v457 = vmul.f32 %v135, %v425
      %vm458 = vcmask 124930
      %v459 = vsel %vm458, %v442, 0.0
      %460 = vadd.xlane.f32.xlu0 %v459
      %v461 = vpop.xlane.xlu0 %460
      %v462 = vsel %vm458, %v443, 0.0
      %463 = vadd.xlane.f32.xlu0 %v462
      %v464 = vpop.xlane.xlu0 %463
      %v465 = vsel %vm458, %v444, 0.0
      %466 = vadd.xlane.f32.xlu0 %v465
      %v467 = vpop.xlane.xlu0 %466
      %v468 = vsel %vm458, %v445, 0.0
      %469 = vadd.xlane.f32.xlu0 %v468
      %v470 = vpop.xlane.xlu0 %469
      %v471 = vsel %vm458, %v446, 0.0
      %472 = vadd.xlane.f32.xlu0 %v471
      %v473 = vpop.xlane.xlu0 %472
      %v474 = vsel %vm458, %v447, 0.0
      %475 = vadd.xlane.f32.xlu0 %v474
      %v476 = vpop.xlane.xlu0 %475
      %v477 = vsel %vm458, %v448, 0.0
      %478 = vadd.xlane.f32.xlu0 %v477
      %v479 = vpop.xlane.xlu0 %478
      %v480 = vsel %vm458, %v449, 0.0
      %481 = vadd.xlane.f32.xlu0 %v480
      %v482 = vpop.xlane.xlu0 %481
      %v483 = vsel %vm458, %v450, 0.0
      %484 = vadd.xlane.f32.xlu0 %v483
      %v485 = vpop.xlane.xlu0 %484
      %v486 = vsel %vm458, %v451, 0.0
      %487 = vadd.xlane.f32.xlu0 %v486
      %v488 = vpop.xlane.xlu0 %487
      %v489 = vsel %vm458, %v452, 0.0
      %490 = vadd.xlane.f32.xlu0 %v489
      %v491 = vpop.xlane.xlu0 %490
      %v492 = vsel %vm458, %v453, 0.0
      %493 = vadd.xlane.f32.xlu0 %v492
      %v494 = vpop.xlane.xlu0 %493
      %v495 = vsel %vm458, %v454, 0.0
      %496 = vadd.xlane.f32.xlu0 %v495
      %v497 = vpop.xlane.xlu0 %496
      %v498 = vsel %vm458, %v455, 0.0
      %499 = vadd.xlane.f32.xlu0 %v498
      %v500 = vpop.xlane.xlu0 %499
      %v501 = vsel %vm458, %v456, 0.0
      %502 = vadd.xlane.f32.xlu0 %v501
      %v503 = vpop.xlane.xlu0 %502
      %v504 = vsel %vm458, %v457, 0.0
      %505 = vadd.xlane.f32.xlu0 %v504
      %v506 = vpop.xlane.xlu0 %505
      %v523 = vlaneseq
      %v524 = vand.u32 %v523, 127
      %v525 = vadd.s32 %v524, 1
      %v526 = vlaneseq
      %v527 = vshrl.u32 %v526, 7
      %v528 = vsub.s32 %v525, %v527
      %v529 = vrot.slane %v219, %v528
      %v530 = vlaneseq
      %v531 = vshrl.u32 %v530, 7
      %v532 = vsub.s32 %v525, %v531
      %v533 = vrot.slane %v222, %v532
      %v534 = vlaneseq
      %v535 = vshrl.u32 %v534, 7
      %v536 = vsub.s32 %v525, %v535
      %v537 = vrot.slane %v225, %v536
      %v538 = vlaneseq
      %v539 = vshrl.u32 %v538, 7
      %v540 = vsub.s32 %v525, %v539
      %v541 = vrot.slane %v228, %v540
      %v542 = vlaneseq
      %v543 = vshrl.u32 %v542, 7
      %v544 = vsub.s32 %v525, %v543
      %v545 = vrot.slane %v231, %v544
      %v546 = vlaneseq
      %v547 = vshrl.u32 %v546, 7
      %v548 = vsub.s32 %v525, %v547
      %v549 = vrot.slane %v234, %v548
      %v550 = vlaneseq
      %v551 = vshrl.u32 %v550, 7
      %v552 = vsub.s32 %v525, %v551
      %v553 = vrot.slane %v237, %v552
      %v554 = vlaneseq
      %v555 = vshrl.u32 %v554, 7
      %v556 = vsub.s32 %v525, %v555
      %v557 = vrot.slane %v240, %v556
      %v558 = vlaneseq
      %v559 = vshrl.u32 %v558, 7
      %v560 = vsub.s32 %v525, %v559
      %v561 = vrot.slane %v243, %v560
      %v562 = vlaneseq
      %v563 = vshrl.u32 %v562, 7
      %v564 = vsub.s32 %v525, %v563
      %v565 = vrot.slane %v246, %v564
      %v566 = vlaneseq
      %v567 = vshrl.u32 %v566, 7
      %v568 = vsub.s32 %v525, %v567
      %v569 = vrot.slane %v249, %v568
      %v570 = vlaneseq
      %v571 = vshrl.u32 %v570, 7
      %v572 = vsub.s32 %v525, %v571
      %v573 = vrot.slane %v252, %v572
      %v574 = vlaneseq
      %v575 = vshrl.u32 %v574, 7
      %v576 = vsub.s32 %v525, %v575
      %v577 = vrot.slane %v255, %v576
      %v578 = vlaneseq
      %v579 = vshrl.u32 %v578, 7
      %v580 = vsub.s32 %v525, %v579
      %v581 = vrot.slane %v258, %v580
      %v582 = vlaneseq
      %v583 = vshrl.u32 %v582, 7
      %v584 = vsub.s32 %v525, %v583
      %v585 = vrot.slane %v261, %v584
      %v586 = vlaneseq
      %v587 = vshrl.u32 %v586, 7
      %v588 = vsub.s32 %v525, %v587
      %v589 = vrot.slane %v264, %v588
      %vm590 = vcmask 1042434
      %v591 = vsel %vm590, %v533, %v529
      %vm592 = vcmask 1043459
      %v593 = vsel %vm592, %v537, %v591
      %vm594 = vcmask 1044484
      %v595 = vsel %vm594, %v541, %v593
      %vm596 = vcmask 1045509
      %v597 = vsel %vm596, %v545, %v595
      %vm598 = vcmask 1046534
      %v599 = vsel %vm598, %v549, %v597
      %vm600 = vcmask 1047559
      %v601 = vsel %vm600, %v553, %v599
      %vm602 = vcmask 1041409
      %v603 = vsel %vm602, %v561, %v557
      %v604 = vsel %vm590, %v565, %v603
      %v605 = vsel %vm592, %v569, %v604
      %v606 = vsel %vm594, %v573, %v605
      %v607 = vsel %vm596, %v577, %v606
      %v608 = vsel %vm598, %v581, %v607
      %v609 = vsel %vm600, %v585, %v608
      %v629 = vadd.s32 %v524, 4294967295
      %v630 = vlaneseq
      %v631 = vshrl.u32 %v630, 7
      %v632 = vsub.s32 %v629, %v631
      %v633 = vrot.slane %v348, %v632
      %v634 = vlaneseq
      %v635 = vshrl.u32 %v634, 7
      %v636 = vsub.s32 %v629, %v635
      %v637 = vrot.slane %v351, %v636
      %v638 = vlaneseq
      %v639 = vshrl.u32 %v638, 7
      %v640 = vsub.s32 %v629, %v639
      %v641 = vrot.slane %v354, %v640
      %v642 = vlaneseq
      %v643 = vshrl.u32 %v642, 7
      %v644 = vsub.s32 %v629, %v643
      %v645 = vrot.slane %v357, %v644
      %v646 = vlaneseq
      %v647 = vshrl.u32 %v646, 7
      %v648 = vsub.s32 %v629, %v647
      %v649 = vrot.slane %v360, %v648
      %v650 = vlaneseq
      %v651 = vshrl.u32 %v650, 7
      %v652 = vsub.s32 %v629, %v651
      %v653 = vrot.slane %v363, %v652
      %v654 = vlaneseq
      %v655 = vshrl.u32 %v654, 7
      %v656 = vsub.s32 %v629, %v655
      %v657 = vrot.slane %v366, %v656
      %v658 = vlaneseq
      %v659 = vshrl.u32 %v658, 7
      %v660 = vsub.s32 %v629, %v659
      %v661 = vrot.slane %v369, %v660
      %v662 = vlaneseq
      %v663 = vshrl.u32 %v662, 7
      %v664 = vsub.s32 %v629, %v663
      %v665 = vrot.slane %v372, %v664
      %v666 = vlaneseq
      %v667 = vshrl.u32 %v666, 7
      %v668 = vsub.s32 %v629, %v667
      %v669 = vrot.slane %v375, %v668
      %v670 = vlaneseq
      %v671 = vshrl.u32 %v670, 7
      %v672 = vsub.s32 %v629, %v671
      %v673 = vrot.slane %v378, %v672
      %v674 = vlaneseq
      %v675 = vshrl.u32 %v674, 7
      %v676 = vsub.s32 %v629, %v675
      %v677 = vrot.slane %v381, %v676
      %v678 = vlaneseq
      %v679 = vshrl.u32 %v678, 7
      %v680 = vsub.s32 %v629, %v679
      %v681 = vrot.slane %v384, %v680
      %v682 = vlaneseq
      %v683 = vshrl.u32 %v682, 7
      %v684 = vsub.s32 %v629, %v683
      %v685 = vrot.slane %v387, %v684
      %v686 = vlaneseq
      %v687 = vshrl.u32 %v686, 7
      %v688 = vsub.s32 %v629, %v687
      %v689 = vrot.slane %v390, %v688
      %v690 = vlaneseq
      %v691 = vshrl.u32 %v690, 7
      %v692 = vsub.s32 %v629, %v691
      %v693 = vrot.slane %v393, %v692
      %v694 = vsel %vm590, %v637, %v633
      %v695 = vsel %vm592, %v641, %v694
      %v696 = vsel %vm594, %v645, %v695
      %v697 = vsel %vm596, %v649, %v696
      %v698 = vsel %vm598, %v653, %v697
      %v699 = vsel %vm600, %v657, %v698
      %v700 = vsel %vm602, %v665, %v661
      %v701 = vsel %vm590, %v669, %v700
      %v702 = vsel %vm592, %v673, %v701
      %v703 = vsel %vm594, %v677, %v702
      %v704 = vsel %vm596, %v681, %v703
      %v705 = vsel %vm598, %v685, %v704
      %v706 = vsel %vm600, %v689, %v705
      %v726 = vrot.slane %v461, 1
      %v727 = vsel %vm590, %v464, %v726
      %v728 = vrot.slane %v467, 7
      %v729 = vsel %vm592, %v728, %v727
      %v730 = vrot.slane %v470, 6
      %v731 = vsel %vm594, %v730, %v729
      %v732 = vrot.slane %v473, 5
      %v733 = vsel %vm596, %v732, %v731
      %v734 = vrot.slane %v476, 4
      %v735 = vsel %vm598, %v734, %v733
      %v736 = vrot.slane %v479, 3
      %v737 = vsel %vm600, %v736, %v735
      %v738 = vrot.slane %v482, 2
      %v739 = vrot.slane %v485, 1
      %v740 = vsel %vm602, %v739, %v738
      %v741 = vsel %vm590, %v488, %v740
      %v742 = vrot.slane %v491, 7
      %v743 = vsel %vm592, %v742, %v741
      %v744 = vrot.slane %v494, 6
      %v745 = vsel %vm594, %v744, %v743
      %v746 = vrot.slane %v497, 5
      %v747 = vsel %vm596, %v746, %v745
      %v748 = vrot.slane %v500, 4
      %v749 = vsel %vm598, %v748, %v747
      %v750 = vrot.slane %v503, 3
      %v751 = vsel %vm600, %v750, %v749
      %v752 = vrot.slane %v506, 2
      %vm756 = vcmask 23552
      %v757 = vsel %vm756, %v601, %v699
      %v758 = vsel %vm756, %v609, %v706
      %v759 = vsel %vm756, %v589, %v693
      %vm760 = vcmask 39936
      %v761 = vsel %vm760, %v757, %v737
      %v762 = vsel %vm760, %v758, %v751
      %v763 = vsel %vm760, %v759, %v752
      %vm764 = vcmask 48129
      %765 = vst.msk [vmem:[%s118 - $0x1] sm:$0xfe] %vm764, %v761
      %vm766 = vcmask 48128
      %767 = vst.msk [vmem:[%s118 + $0x7] sm:$0xff] %vm766, %v762
      %vm768 = vcmask 40960
      %769 = vst.msk [vmem:[%s118 + $0xf] sm:$0x1] %vm768, %v763
      %s770 = smul.u32 2, %s12
      %p771 = scmp.lt.s32.totalorder %s770, 5
      %s772 = scalar_select %p771, %s770, 5
      %s773 = smul.addr %s772, 8
      %s774 = scalar_lea.vmem %s1, %s773
      // Predicated region
      $region25: #{tpu_custom_call.1} parent=23 // pred_check
        %p775 = pneg %p56
      $region26: #{tpu_custom_call.1} parent=23 // pred_check_branch
        %777 = sbr.rel (%p775) target = $region28
      $region27: #{tpu_custom_call.1} parent=23 // pred_region
        %s778 = smul.u32 2, %s12
      $region28: #{tpu_custom_call.1} parent=23 // pred_fallthru
        _
    $region24: #{tpu_custom_call.1} parent=5 // pred_fallthru
      _
    %p779 = scmp.le.s32.totalorder 2, %s7
    // Predicated region
    $region29: #{tpu_custom_call.1} parent=5 // pred_check
      %p780 = pneg %p779
    $region30: #{tpu_custom_call.1} parent=5 // pred_check_branch
      %782 = sbr.rel (%p780) target = $region32
    $region31: #{tpu_custom_call.1} parent=5 // pred_region
      %s783 = ssub.s32 %s7, 2
      // Predicated region
      $region33: #{tpu_custom_call.1} parent=31 // pred_check
        %p784 = pneg %p62
      $region34: #{tpu_custom_call.1} parent=31 // pred_check_branch
        %786 = sbr.rel (%p784) target = $region36
      $region35: #{tpu_custom_call.1} parent=31 // pred_region
        %s787 = smul.u32 2, %s13
        %p788 = scmp.lt.s32.totalorder %s787, 5
        %s789 = scalar_select %p788, %s787, 5
        %s790 = smul.addr %s789, 8
        %s791 = scalar_lea.vmem %s1, %s790
      $region36: #{tpu_custom_call.1} parent=31 // pred_fallthru
        _
    $region32: #{tpu_custom_call.1} parent=5 // pred_fallthru
      _
  $region6: #{tpu_custom_call.1} parent=0 // loop_footer
    %s11 = sadd.s32 1, %s7
  $region7: #{tpu_custom_call.1} parent=0 // loop_footer_branch
    %6 = sbr.rel target = $region3
  $region8: #{tpu_custom_call.1} parent=0 // loop_exit
    _

</llo_original>
